<compile_context>
chip_gen: v5e
topology: v5e:2x2
jax: 0.10.0
libtpu: 0.0.40
codegen_flags: <defaults>
</compile_context>

<pallas_src>
import jax
import jax.numpy as jnp
from jax.experimental import pallas as pl
from jax.experimental.pallas import tpu as pltpu


def _round_up(x, m):
    return ((x + m - 1) // m) * m


def reshead_kernel(x_ref, w_ref, b_ref, o_ref):
    # x_ref: (TN, HW, C)  channels-last activation tile
    # w_ref: (C, NCP)     fc weight, transposed, pre-scaled by 1/(H*W), zero-padded to NCP
    # b_ref: (1, NCP)     fc bias, zero-padded to NCP
    # o_ref: (TN, NCP)
    x = x_ref[...]
    # Global average pool: spatial (sublane) sum in f32; the 1/(H*W) scale lives in w_ref.
    pooled = jnp.sum(x.astype(jnp.float32), axis=1)                  # (TN, C)
    # FC on the MXU with f32 accumulation.
    out = jnp.dot(pooled.astype(w_ref.dtype), w_ref[...],
                  preferred_element_type=jnp.float32)                # (TN, NCP)
    out = out + b_ref[...].astype(jnp.float32)                       # bias broadcast
    o_ref[...] = out.astype(o_ref.dtype)


def res_head_forward(x_nchw, fc_weight, fc_bias):
    """x_nchw: (N, C, H, W); fc_weight: (nc, w_in) [PyTorch layout]; fc_bias: (nc,)."""
    N, C, H, W = x_nchw.shape
    nc = fc_weight.shape[0]
    HW = H * W

    # ---- wrapper-side layout plumbing (plain JAX glue) ----
    # channels-last: (N, HW, C) so C is on the lane axis inside the kernel.
    x_cl = x_nchw.reshape(N, C, HW).transpose(0, 2, 1)

    # Pad the class dim to a multiple of 128 for lane-dense, unmasked stores.
    ncp = _round_up(nc, 128)
    # Fold the avg-pool scale into the weight (in f32 for precision) so the
    # kernel uses a plain spatial sum.
    w_t = (fc_weight.astype(jnp.float32).T / jnp.float32(HW)).astype(fc_weight.dtype)  # (C, nc)
    w_pad = jnp.zeros((C, ncp), dtype=w_t.dtype).at[:, :nc].set(w_t)
    b_pad = jnp.zeros((1, ncp), dtype=fc_bias.dtype).at[0, :nc].set(fc_bias)

    # ---- batch-tile sizing ----
    # Double-buffered x stream is the dominant VMEM user; keep 2 * tile <= ~24 MiB
    # so everything (x stream + params + output) fits comfortably in v7x's 64 MiB.
    dtype_bytes = jnp.dtype(x_nchw.dtype).itemsize
    bytes_per_row = HW * C * dtype_bytes
    x_budget_per_buffer = 12 * 1024 * 1024
    tn_cap = max(8, min(256, (x_budget_per_buffer // max(bytes_per_row, 1)) // 8 * 8))
    tn = min(tn_cap, _round_up(N, 8))
    n_pad = _round_up(N, tn)
    if n_pad != N:
        # Zero-pad the batch; padded rows produce bias-only garbage and are sliced off.
        x_cl = jnp.concatenate(
            [x_cl, jnp.zeros((n_pad - N, HW, C), dtype=x_cl.dtype)], axis=0)

    grid = (n_pad // tn,)

    out_padded = pl.pallas_call(
        reshead_kernel,
        out_shape=jax.ShapeDtypeStruct((n_pad, ncp), x_nchw.dtype),
        grid=grid,
        in_specs=[
            # Batch-tiled activation stream (double-buffered by Pallas).
            pl.BlockSpec((tn, HW, C), lambda i: (i, 0, 0)),
            # Weights / bias: constant block index -> resident across the grid.
            pl.BlockSpec((C, ncp), lambda i: (0, 0)),
            pl.BlockSpec((1, ncp), lambda i: (0, 0)),
        ],
        out_specs=pl.BlockSpec((tn, ncp), lambda i: (i, 0)),
        compiler_params=pltpu.CompilerParams(
            dimension_semantics=("parallel",),           # shards over v7x's 2 TCs
            vmem_limit_bytes=56 * 1024 * 1024,           # headroom under 64 MiB (v7x)
        ),
    )(x_cl, w_pad, b_pad)

    # Strip batch and class padding.
    return out_padded[:N, :nc]


def reference_forward(x_nchw, fc_weight, fc_bias):
    pooled = jnp.mean(x_nchw, axis=(2, 3))               # (N, C)
    return pooled @ fc_weight.T + fc_bias[None, :]       # (N, nc)


if __name__ == "__main__":
    # Small shapes consistent with the module: batch=2, w_in (channels)=4,
    # spatial 16x16, nc (classes)=8.
    N, C, H, W = 2, 4, 16, 16
    NC = 8

    key = jax.random.PRNGKey(0)
    kx, kw, kb = jax.random.split(key, 3)

    x = jax.random.normal(kx, (N, C, H, W), dtype=jnp.float32)

    # Deterministic param init mirroring nn.Linear defaults: U(-1/sqrt(w_in), 1/sqrt(w_in)).
    bound = 1.0 / jnp.sqrt(jnp.float32(C))
    fc_weight = jax.random.uniform(kw, (NC, C), dtype=jnp.float32,
                                   minval=-bound, maxval=bound)
    fc_bias = jax.random.uniform(kb, (NC,), dtype=jnp.float32,
                                 minval=-bound, maxval=bound)

    # TODO(synk): dropout branch (C.ISON.DROPOUT) is identity at inference; not modeled.

    out = res_head_forward(x, fc_weight, fc_bias)
    out = jax.block_until_ready(out)

    ref = reference_forward(x, fc_weight, fc_bias)
    assert out.shape == (N, NC), out.shape
    assert jnp.allclose(out, ref, atol=1e-5, rtol=1e-5), (out, ref)

    print("KERNEL_OK")
</pallas_src>

<mosaic_0001>
module attributes {stable_mosaic.version = 11 : i64} {
  func.func @reshead_kernel(%arg0: i32, %arg1: memref<8x256x4xf32, #tpu.memory_space<vmem>>, %arg2: memref<4x128xf32, #tpu.memory_space<vmem>>, %arg3: memref<1x128xf32, #tpu.memory_space<vmem>>, %arg4: memref<8x128xf32, #tpu.memory_space<vmem>>) attributes {dimension_semantics = [#tpu.dimension_semantics<parallel>], iteration_bounds = array<i64: 1>, scalar_prefetch = 0 : i64, scratch_operands = 0 : i64, tpu.core_type = #tpu.core_type<tc>, window_params = [{transform_indices = @transform_0, window_bounds = array<i64: 8, 256, 4>}, {pipeline_mode = #tpu.pipeline_mode<synchronous>, transform_indices = @transform_1, window_bounds = array<i64: 4, 128>}, {pipeline_mode = #tpu.pipeline_mode<synchronous>, transform_indices = @transform_2, window_bounds = array<i64: 1, 128>}, {transform_indices = @transform_3, window_bounds = array<i64: 8, 128>}]} {
    %c0 = arith.constant 0 : index
    %c0_0 = arith.constant 0 : index
    %c0_1 = arith.constant 0 : index
    %0 = vector.load %arg1[%c0, %c0_0, %c0_1] : memref<8x256x4xf32, #tpu.memory_space<vmem>>, vector<8x256x4xf32>
    %cst = arith.constant dense<0.000000e+00> : vector<8x4xf32>
    %1 = vector.multi_reduction <add>, %0, %cst [1] : vector<8x256x4xf32> to vector<8x4xf32>
    %c0_2 = arith.constant 0 : index
    %c0_3 = arith.constant 0 : index
    %2 = vector.load %arg2[%c0_2, %c0_3] : memref<4x128xf32, #tpu.memory_space<vmem>>, vector<4x128xf32>
    %cst_4 = arith.constant dense<0.000000e+00> : vector<8x128xf32>
    %3 = tpu.matmul %1, %2, %cst_4 {dimension_numbers = #tpu.dot_dimension_numbers<[1], [0], [0], [1], [0, 0, 1, 1], [], []>} : vector<8x4xf32>, vector<4x128xf32>, vector<8x128xf32> -> vector<8x128xf32>
    %c0_5 = arith.constant 0 : index
    %c0_6 = arith.constant 0 : index
    %4 = vector.load %arg3[%c0_5, %c0_6] : memref<1x128xf32, #tpu.memory_space<vmem>>, vector<1x128xf32>
    %5 = vector.broadcast %4 : vector<1x128xf32> to vector<8x128xf32>
    %6 = arith.addf %3, %5 : vector<8x128xf32>
    %c0_7 = arith.constant 0 : index
    %c0_8 = arith.constant 0 : index
    %7 = vector.load %arg4[%c0_7, %c0_8] : memref<8x128xf32, #tpu.memory_space<vmem>>, vector<8x128xf32>
    tpu.vector_store %arg4[%c0_7, %c0_8], %6 {strides = array<i32>} : memref<8x128xf32, #tpu.memory_space<vmem>>, vector<8x128xf32>,
    return
  }
  func.func @transform_0(%arg0: i32) -> (i32, i32, i32) {
    %c0_i32 = arith.constant 0 : i32
    %c0_i32_0 = arith.constant 0 : i32
    %c0_i32_1 = arith.constant 0 : i32
    return %arg0, %c0_i32, %c0_i32_0 : i32, i32, i32
  }
  func.func @transform_1(%arg0: i32) -> (i32, i32) {
    %c0_i32 = arith.constant 0 : i32
    %c0_i32_0 = arith.constant 0 : i32
    %c0_i32_1 = arith.constant 0 : i32
    return %c0_i32, %c0_i32_0 : i32, i32
  }
  func.func @transform_2(%arg0: i32) -> (i32, i32) {
    %c0_i32 = arith.constant 0 : i32
    %c0_i32_0 = arith.constant 0 : i32
    %c0_i32_1 = arith.constant 0 : i32
    return %c0_i32, %c0_i32_0 : i32, i32
  }
  func.func @transform_3(%arg0: i32) -> (i32, i32) {
    %c0_i32 = arith.constant 0 : i32
    %c0_i32_0 = arith.constant 0 : i32
    return %arg0, %c0_i32 : i32, i32
  }
}

</mosaic_0001>

<llo_original>
// kernel: tpu_custom_call.1
$region0: #{tpu_custom_call.1}
  #allocation0 [shape = 'u32[]', space=smem, size = 0x4, offset = 0x4, fixed_abs, tag = 'smem constant byte address 0x4 - core index']
  #allocation1 [shape = 'u32[72,128]{1,0:T(1,128)}', space=vmem, size = 0x9000, scoped, tag = 'internal scratch']
  %s0 = inlined_call_operand.vmem [shape: f32[8,256,4], index: 0, kind: input, shape index: {}]
  %s1 = inlined_call_operand.vmem [shape: f32[4,128], index: 1, kind: input, shape index: {}]
  %s2 = inlined_call_operand.vmem [shape: f32[1,128], index: 2, kind: input, shape index: {}]
  %s3 = inlined_call_operand.hbm [shape: f32[8,128], index: 3, kind: output, shape index: {}]
  %s4 = sld [smem:[#allocation0]]
  $region22: #{tpu_custom_call.1} parent=0
    _
  %s6 = ssub.s32 1, %s4
  %s7 = scalar_select 0, %s6, %s4
  $region1: #{tpu_custom_call.1} parent=0
    #allocation2 [shape = 'u8[4096]{0}', space=vmem, size = 0x1000, scoped, tag = 'output window, operand 0, single buffered']
    #allocation3 [shape = 's32[1]{0}', space=sflag, size = 0x4, scoped, tag = 'scoped memory for tpu_custom_call.1']
    %8 = vsyncpa [#allocation3], 0
    // Predicated region
    $region2: #{tpu_custom_call.1} parent=1 // pred_check
      _
    $region3: #{tpu_custom_call.1} parent=1 // pred_check_branch
      %10 = sbr.rel (0) target = $region5
    $region4: #{tpu_custom_call.1} parent=1 // pred_region
      _
    $region5: #{tpu_custom_call.1} parent=1 // pred_fallthru
      _
    // Predicated region
    $region6: #{tpu_custom_call.1} parent=1 // pred_check
      _
    $region7: #{tpu_custom_call.1} parent=1 // pred_check_branch
      %12 = sbr.rel (0) target = $region9
    $region8: #{tpu_custom_call.1} parent=1 // pred_region
      _
    $region9: #{tpu_custom_call.1} parent=1 // pred_fallthru
      _
    // Predicated region
    $region10: #{tpu_custom_call.1} parent=1 // pred_check
      _
    $region11: #{tpu_custom_call.1} parent=1 // pred_check_branch
      %14 = sbr.rel (0) target = $region13
    $region12: #{tpu_custom_call.1} parent=1 // pred_region
      _
    $region13: #{tpu_custom_call.1} parent=1 // pred_fallthru
      _
    %v15 = vld [vmem:[%s0] sm:$0xff]
    %v16 = vld [vmem:[%s0 + $0x8] sm:$0xff]
    %v17 = vld [vmem:[%s0 + $0x10] sm:$0xff]
    %v18 = vld [vmem:[%s0 + $0x18] sm:$0xff]
    %v19 = vld [vmem:[%s0 + $0x20] sm:$0xff]
    %v20 = vld [vmem:[%s0 + $0x28] sm:$0xff]
    %v21 = vld [vmem:[%s0 + $0x30] sm:$0xff]
    %v22 = vld [vmem:[%s0 + $0x38] sm:$0xff]
    %v23 = vld [vmem:[%s0 + $0x40] sm:$0xff]
    %v24 = vld [vmem:[%s0 + $0x48] sm:$0xff]
    %v25 = vld [vmem:[%s0 + $0x50] sm:$0xff]
    %v26 = vld [vmem:[%s0 + $0x58] sm:$0xff]
    %v27 = vld [vmem:[%s0 + $0x60] sm:$0xff]
    %v28 = vld [vmem:[%s0 + $0x68] sm:$0xff]
    %v29 = vld [vmem:[%s0 + $0x70] sm:$0xff]
    %v30 = vld [vmem:[%s0 + $0x78] sm:$0xff]
    %v31 = vld [vmem:[%s0 + $0x80] sm:$0xff]
    %v32 = vld [vmem:[%s0 + $0x88] sm:$0xff]
    %v33 = vld [vmem:[%s0 + $0x90] sm:$0xff]
    %v34 = vld [vmem:[%s0 + $0x98] sm:$0xff]
    %v35 = vld [vmem:[%s0 + $0xa0] sm:$0xff]
    %v36 = vld [vmem:[%s0 + $0xa8] sm:$0xff]
    %v37 = vld [vmem:[%s0 + $0xb0] sm:$0xff]
    %v38 = vld [vmem:[%s0 + $0xb8] sm:$0xff]
    %v39 = vld [vmem:[%s0 + $0xc0] sm:$0xff]
    %v40 = vld [vmem:[%s0 + $0xc8] sm:$0xff]
    %v41 = vld [vmem:[%s0 + $0xd0] sm:$0xff]
    %v42 = vld [vmem:[%s0 + $0xd8] sm:$0xff]
    %v43 = vld [vmem:[%s0 + $0xe0] sm:$0xff]
    %v44 = vld [vmem:[%s0 + $0xe8] sm:$0xff]
    %v45 = vld [vmem:[%s0 + $0xf0] sm:$0xff]
    %v46 = vld [vmem:[%s0 + $0xf8] sm:$0xff]
    %v47 = vld [vmem:[%s0 + $0x100] sm:$0xff]
    %v48 = vld [vmem:[%s0 + $0x108] sm:$0xff]
    %v49 = vld [vmem:[%s0 + $0x110] sm:$0xff]
    %v50 = vld [vmem:[%s0 + $0x118] sm:$0xff]
    %v51 = vld [vmem:[%s0 + $0x120] sm:$0xff]
    %v52 = vld [vmem:[%s0 + $0x128] sm:$0xff]
    %v53 = vld [vmem:[%s0 + $0x130] sm:$0xff]
    %v54 = vld [vmem:[%s0 + $0x138] sm:$0xff]
    %v55 = vld [vmem:[%s0 + $0x140] sm:$0xff]
    %v56 = vld [vmem:[%s0 + $0x148] sm:$0xff]
    %v57 = vld [vmem:[%s0 + $0x150] sm:$0xff]
    %v58 = vld [vmem:[%s0 + $0x158] sm:$0xff]
    %v59 = vld [vmem:[%s0 + $0x160] sm:$0xff]
    %v60 = vld [vmem:[%s0 + $0x168] sm:$0xff]
    %v61 = vld [vmem:[%s0 + $0x170] sm:$0xff]
    %v62 = vld [vmem:[%s0 + $0x178] sm:$0xff]
    %v63 = vld [vmem:[%s0 + $0x180] sm:$0xff]
    %v64 = vld [vmem:[%s0 + $0x188] sm:$0xff]
    %v65 = vld [vmem:[%s0 + $0x190] sm:$0xff]
    %v66 = vld [vmem:[%s0 + $0x198] sm:$0xff]
    %v67 = vld [vmem:[%s0 + $0x1a0] sm:$0xff]
    %v68 = vld [vmem:[%s0 + $0x1a8] sm:$0xff]
    %v69 = vld [vmem:[%s0 + $0x1b0] sm:$0xff]
    %v70 = vld [vmem:[%s0 + $0x1b8] sm:$0xff]
    %v71 = vld [vmem:[%s0 + $0x1c0] sm:$0xff]
    %v72 = vld [vmem:[%s0 + $0x1c8] sm:$0xff]
    %v73 = vld [vmem:[%s0 + $0x1d0] sm:$0xff]
    %v74 = vld [vmem:[%s0 + $0x1d8] sm:$0xff]
    %v75 = vld [vmem:[%s0 + $0x1e0] sm:$0xff]
    %v76 = vld [vmem:[%s0 + $0x1e8] sm:$0xff]
    %v77 = vld [vmem:[%s0 + $0x1f0] sm:$0xff]
    %v78 = vld [vmem:[%s0 + $0x1f8] sm:$0xff]
    %v79 = vld [vmem:[%s0 + $0x200] sm:$0xff]
    %v80 = vld [vmem:[%s0 + $0x208] sm:$0xff]
    %v81 = vld [vmem:[%s0 + $0x210] sm:$0xff]
    %v82 = vld [vmem:[%s0 + $0x218] sm:$0xff]
    %v83 = vld [vmem:[%s0 + $0x220] sm:$0xff]
    %v84 = vld [vmem:[%s0 + $0x228] sm:$0xff]
    %v85 = vld [vmem:[%s0 + $0x230] sm:$0xff]
    %v86 = vld [vmem:[%s0 + $0x238] sm:$0xff]
    %v87 = vld [vmem:[%s0 + $0x240] sm:$0xff]
    %v88 = vld [vmem:[%s0 + $0x248] sm:$0xff]
    %v89 = vld [vmem:[%s0 + $0x250] sm:$0xff]
    %v90 = vld [vmem:[%s0 + $0x258] sm:$0xff]
    %v91 = vld [vmem:[%s0 + $0x260] sm:$0xff]
    %v92 = vld [vmem:[%s0 + $0x268] sm:$0xff]
    %v93 = vld [vmem:[%s0 + $0x270] sm:$0xff]
    %v94 = vld [vmem:[%s0 + $0x278] sm:$0xff]
    %v95 = vld [vmem:[%s0 + $0x280] sm:$0xff]
    %v96 = vld [vmem:[%s0 + $0x288] sm:$0xff]
    %v97 = vld [vmem:[%s0 + $0x290] sm:$0xff]
    %v98 = vld [vmem:[%s0 + $0x298] sm:$0xff]
    %v99 = vld [vmem:[%s0 + $0x2a0] sm:$0xff]
    %v100 = vld [vmem:[%s0 + $0x2a8] sm:$0xff]
    %v101 = vld [vmem:[%s0 + $0x2b0] sm:$0xff]
    %v102 = vld [vmem:[%s0 + $0x2b8] sm:$0xff]
    %v103 = vld [vmem:[%s0 + $0x2c0] sm:$0xff]
    %v104 = vld [vmem:[%s0 + $0x2c8] sm:$0xff]
    %v105 = vld [vmem:[%s0 + $0x2d0] sm:$0xff]
    %v106 = vld [vmem:[%s0 + $0x2d8] sm:$0xff]
    %v107 = vld [vmem:[%s0 + $0x2e0] sm:$0xff]
    %v108 = vld [vmem:[%s0 + $0x2e8] sm:$0xff]
    %v109 = vld [vmem:[%s0 + $0x2f0] sm:$0xff]
    %v110 = vld [vmem:[%s0 + $0x2f8] sm:$0xff]
    %v111 = vld [vmem:[%s0 + $0x300] sm:$0xff]
    %v112 = vld [vmem:[%s0 + $0x308] sm:$0xff]
    %v113 = vld [vmem:[%s0 + $0x310] sm:$0xff]
    %v114 = vld [vmem:[%s0 + $0x318] sm:$0xff]
    %v115 = vld [vmem:[%s0 + $0x320] sm:$0xff]
    %v116 = vld [vmem:[%s0 + $0x328] sm:$0xff]
    %v117 = vld [vmem:[%s0 + $0x330] sm:$0xff]
    %v118 = vld [vmem:[%s0 + $0x338] sm:$0xff]
    %v119 = vld [vmem:[%s0 + $0x340] sm:$0xff]
    %v120 = vld [vmem:[%s0 + $0x348] sm:$0xff]
    %v121 = vld [vmem:[%s0 + $0x350] sm:$0xff]
    %v122 = vld [vmem:[%s0 + $0x358] sm:$0xff]
    %v123 = vld [vmem:[%s0 + $0x360] sm:$0xff]
    %v124 = vld [vmem:[%s0 + $0x368] sm:$0xff]
    %v125 = vld [vmem:[%s0 + $0x370] sm:$0xff]
    %v126 = vld [vmem:[%s0 + $0x378] sm:$0xff]
    %v127 = vld [vmem:[%s0 + $0x380] sm:$0xff]
    %v128 = vld [vmem:[%s0 + $0x388] sm:$0xff]
    %v129 = vld [vmem:[%s0 + $0x390] sm:$0xff]
    %v130 = vld [vmem:[%s0 + $0x398] sm:$0xff]
    %v131 = vld [vmem:[%s0 + $0x3a0] sm:$0xff]
    %v132 = vld [vmem:[%s0 + $0x3a8] sm:$0xff]
    %v133 = vld [vmem:[%s0 + $0x3b0] sm:$0xff]
    %v134 = vld [vmem:[%s0 + $0x3b8] sm:$0xff]
    %v135 = vld [vmem:[%s0 + $0x3c0] sm:$0xff]
    %v136 = vld [vmem:[%s0 + $0x3c8] sm:$0xff]
    %v137 = vld [vmem:[%s0 + $0x3d0] sm:$0xff]
    %v138 = vld [vmem:[%s0 + $0x3d8] sm:$0xff]
    %v139 = vld [vmem:[%s0 + $0x3e0] sm:$0xff]
    %v140 = vld [vmem:[%s0 + $0x3e8] sm:$0xff]
    %v141 = vld [vmem:[%s0 + $0x3f0] sm:$0xff]
    %v142 = vld [vmem:[%s0 + $0x3f8] sm:$0xff]
    %v143 = vld [vmem:[%s0 + $0x400] sm:$0xff]
    %v144 = vld [vmem:[%s0 + $0x408] sm:$0xff]
    %v145 = vld [vmem:[%s0 + $0x410] sm:$0xff]
    %v146 = vld [vmem:[%s0 + $0x418] sm:$0xff]
    %v147 = vld [vmem:[%s0 + $0x420] sm:$0xff]
    %v148 = vld [vmem:[%s0 + $0x428] sm:$0xff]
    %v149 = vld [vmem:[%s0 + $0x430] sm:$0xff]
    %v150 = vld [vmem:[%s0 + $0x438] sm:$0xff]
    %v151 = vld [vmem:[%s0 + $0x440] sm:$0xff]
    %v152 = vld [vmem:[%s0 + $0x448] sm:$0xff]
    %v153 = vld [vmem:[%s0 + $0x450] sm:$0xff]
    %v154 = vld [vmem:[%s0 + $0x458] sm:$0xff]
    %v155 = vld [vmem:[%s0 + $0x460] sm:$0xff]
    %v156 = vld [vmem:[%s0 + $0x468] sm:$0xff]
    %v157 = vld [vmem:[%s0 + $0x470] sm:$0xff]
    %v158 = vld [vmem:[%s0 + $0x478] sm:$0xff]
    %v159 = vld [vmem:[%s0 + $0x480] sm:$0xff]
    %v160 = vld [vmem:[%s0 + $0x488] sm:$0xff]
    %v161 = vld [vmem:[%s0 + $0x490] sm:$0xff]
    %v162 = vld [vmem:[%s0 + $0x498] sm:$0xff]
    %v163 = vld [vmem:[%s0 + $0x4a0] sm:$0xff]
    %v164 = vld [vmem:[%s0 + $0x4a8] sm:$0xff]
    %v165 = vld [vmem:[%s0 + $0x4b0] sm:$0xff]
    %v166 = vld [vmem:[%s0 + $0x4b8] sm:$0xff]
    %v167 = vld [vmem:[%s0 + $0x4c0] sm:$0xff]
    %v168 = vld [vmem:[%s0 + $0x4c8] sm:$0xff]
    %v169 = vld [vmem:[%s0 + $0x4d0] sm:$0xff]
    %v170 = vld [vmem:[%s0 + $0x4d8] sm:$0xff]
    %v171 = vld [vmem:[%s0 + $0x4e0] sm:$0xff]
    %v172 = vld [vmem:[%s0 + $0x4e8] sm:$0xff]
    %v173 = vld [vmem:[%s0 + $0x4f0] sm:$0xff]
    %v174 = vld [vmem:[%s0 + $0x4f8] sm:$0xff]
    %v175 = vld [vmem:[%s0 + $0x500] sm:$0xff]
    %v176 = vld [vmem:[%s0 + $0x508] sm:$0xff]
    %v177 = vld [vmem:[%s0 + $0x510] sm:$0xff]
    %v178 = vld [vmem:[%s0 + $0x518] sm:$0xff]
    %v179 = vld [vmem:[%s0 + $0x520] sm:$0xff]
    %v180 = vld [vmem:[%s0 + $0x528] sm:$0xff]
    %v181 = vld [vmem:[%s0 + $0x530] sm:$0xff]
    %v182 = vld [vmem:[%s0 + $0x538] sm:$0xff]
    %v183 = vld [vmem:[%s0 + $0x540] sm:$0xff]
    %v184 = vld [vmem:[%s0 + $0x548] sm:$0xff]
    %v185 = vld [vmem:[%s0 + $0x550] sm:$0xff]
    %v186 = vld [vmem:[%s0 + $0x558] sm:$0xff]
    %v187 = vld [vmem:[%s0 + $0x560] sm:$0xff]
    %v188 = vld [vmem:[%s0 + $0x568] sm:$0xff]
    %v189 = vld [vmem:[%s0 + $0x570] sm:$0xff]
    %v190 = vld [vmem:[%s0 + $0x578] sm:$0xff]
    %v191 = vld [vmem:[%s0 + $0x580] sm:$0xff]
    %v192 = vld [vmem:[%s0 + $0x588] sm:$0xff]
    %v193 = vld [vmem:[%s0 + $0x590] sm:$0xff]
    %v194 = vld [vmem:[%s0 + $0x598] sm:$0xff]
    %v195 = vld [vmem:[%s0 + $0x5a0] sm:$0xff]
    %v196 = vld [vmem:[%s0 + $0x5a8] sm:$0xff]
    %v197 = vld [vmem:[%s0 + $0x5b0] sm:$0xff]
    %v198 = vld [vmem:[%s0 + $0x5b8] sm:$0xff]
    %v199 = vld [vmem:[%s0 + $0x5c0] sm:$0xff]
    %v200 = vld [vmem:[%s0 + $0x5c8] sm:$0xff]
    %v201 = vld [vmem:[%s0 + $0x5d0] sm:$0xff]
    %v202 = vld [vmem:[%s0 + $0x5d8] sm:$0xff]
    %v203 = vld [vmem:[%s0 + $0x5e0] sm:$0xff]
    %v204 = vld [vmem:[%s0 + $0x5e8] sm:$0xff]
    %v205 = vld [vmem:[%s0 + $0x5f0] sm:$0xff]
    %v206 = vld [vmem:[%s0 + $0x5f8] sm:$0xff]
    %v207 = vld [vmem:[%s0 + $0x600] sm:$0xff]
    %v208 = vld [vmem:[%s0 + $0x608] sm:$0xff]
    %v209 = vld [vmem:[%s0 + $0x610] sm:$0xff]
    %v210 = vld [vmem:[%s0 + $0x618] sm:$0xff]
    %v211 = vld [vmem:[%s0 + $0x620] sm:$0xff]
    %v212 = vld [vmem:[%s0 + $0x628] sm:$0xff]
    %v213 = vld [vmem:[%s0 + $0x630] sm:$0xff]
    %v214 = vld [vmem:[%s0 + $0x638] sm:$0xff]
    %v215 = vld [vmem:[%s0 + $0x640] sm:$0xff]
    %v216 = vld [vmem:[%s0 + $0x648] sm:$0xff]
    %v217 = vld [vmem:[%s0 + $0x650] sm:$0xff]
    %v218 = vld [vmem:[%s0 + $0x658] sm:$0xff]
    %v219 = vld [vmem:[%s0 + $0x660] sm:$0xff]
    %v220 = vld [vmem:[%s0 + $0x668] sm:$0xff]
    %v221 = vld [vmem:[%s0 + $0x670] sm:$0xff]
    %v222 = vld [vmem:[%s0 + $0x678] sm:$0xff]
    %v223 = vld [vmem:[%s0 + $0x680] sm:$0xff]
    %v224 = vld [vmem:[%s0 + $0x688] sm:$0xff]
    %v225 = vld [vmem:[%s0 + $0x690] sm:$0xff]
    %v226 = vld [vmem:[%s0 + $0x698] sm:$0xff]
    %v227 = vld [vmem:[%s0 + $0x6a0] sm:$0xff]
    %v228 = vld [vmem:[%s0 + $0x6a8] sm:$0xff]
    %v229 = vld [vmem:[%s0 + $0x6b0] sm:$0xff]
    %v230 = vld [vmem:[%s0 + $0x6b8] sm:$0xff]
    %v231 = vld [vmem:[%s0 + $0x6c0] sm:$0xff]
    %v232 = vld [vmem:[%s0 + $0x6c8] sm:$0xff]
    %v233 = vld [vmem:[%s0 + $0x6d0] sm:$0xff]
    %v234 = vld [vmem:[%s0 + $0x6d8] sm:$0xff]
    %v235 = vld [vmem:[%s0 + $0x6e0] sm:$0xff]
    %v236 = vld [vmem:[%s0 + $0x6e8] sm:$0xff]
    %v237 = vld [vmem:[%s0 + $0x6f0] sm:$0xff]
    %v238 = vld [vmem:[%s0 + $0x6f8] sm:$0xff]
    %v239 = vld [vmem:[%s0 + $0x700] sm:$0xff]
    %v240 = vld [vmem:[%s0 + $0x708] sm:$0xff]
    %v241 = vld [vmem:[%s0 + $0x710] sm:$0xff]
    %v242 = vld [vmem:[%s0 + $0x718] sm:$0xff]
    %v243 = vld [vmem:[%s0 + $0x720] sm:$0xff]
    %v244 = vld [vmem:[%s0 + $0x728] sm:$0xff]
    %v245 = vld [vmem:[%s0 + $0x730] sm:$0xff]
    %v246 = vld [vmem:[%s0 + $0x738] sm:$0xff]
    %v247 = vld [vmem:[%s0 + $0x740] sm:$0xff]
    %v248 = vld [vmem:[%s0 + $0x748] sm:$0xff]
    %v249 = vld [vmem:[%s0 + $0x750] sm:$0xff]
    %v250 = vld [vmem:[%s0 + $0x758] sm:$0xff]
    %v251 = vld [vmem:[%s0 + $0x760] sm:$0xff]
    %v252 = vld [vmem:[%s0 + $0x768] sm:$0xff]
    %v253 = vld [vmem:[%s0 + $0x770] sm:$0xff]
    %v254 = vld [vmem:[%s0 + $0x778] sm:$0xff]
    %v255 = vld [vmem:[%s0 + $0x780] sm:$0xff]
    %v256 = vld [vmem:[%s0 + $0x788] sm:$0xff]
    %v257 = vld [vmem:[%s0 + $0x790] sm:$0xff]
    %v258 = vld [vmem:[%s0 + $0x798] sm:$0xff]
    %v259 = vld [vmem:[%s0 + $0x7a0] sm:$0xff]
    %v260 = vld [vmem:[%s0 + $0x7a8] sm:$0xff]
    %v261 = vld [vmem:[%s0 + $0x7b0] sm:$0xff]
    %v262 = vld [vmem:[%s0 + $0x7b8] sm:$0xff]
    %v263 = vld [vmem:[%s0 + $0x7c0] sm:$0xff]
    %v264 = vld [vmem:[%s0 + $0x7c8] sm:$0xff]
    %v265 = vld [vmem:[%s0 + $0x7d0] sm:$0xff]
    %v266 = vld [vmem:[%s0 + $0x7d8] sm:$0xff]
    %v267 = vld [vmem:[%s0 + $0x7e0] sm:$0xff]
    %v268 = vld [vmem:[%s0 + $0x7e8] sm:$0xff]
    %v269 = vld [vmem:[%s0 + $0x7f0] sm:$0xff]
    %v270 = vld [vmem:[%s0 + $0x7f8] sm:$0xff]
    %vm271 = vcmask 31744
    %v272 = vsel %vm271, %v15, 0.0
    %v273 = vsel %vm271, %v16, 0.0
    %v274 = vadd.f32 %v272, %v273
    %v275 = vsel %vm271, %v17, 0.0
    %v276 = vadd.f32 %v274, %v275
    %v277 = vsel %vm271, %v18, 0.0
    %v278 = vadd.f32 %v276, %v277
    %v279 = vsel %vm271, %v19, 0.0
    %v280 = vadd.f32 %v278, %v279
    %v281 = vsel %vm271, %v20, 0.0
    %v282 = vadd.f32 %v280, %v281
    %v283 = vsel %vm271, %v21, 0.0
    %v284 = vadd.f32 %v282, %v283
    %v285 = vsel %vm271, %v22, 0.0
    %v286 = vadd.f32 %v284, %v285
    %v287 = vsel %vm271, %v23, 0.0
    %v288 = vadd.f32 %v286, %v287
    %v289 = vsel %vm271, %v24, 0.0
    %v290 = vadd.f32 %v288, %v289
    %v291 = vsel %vm271, %v25, 0.0
    %v292 = vadd.f32 %v290, %v291
    %v293 = vsel %vm271, %v26, 0.0
    %v294 = vadd.f32 %v292, %v293
    %v295 = vsel %vm271, %v27, 0.0
    %v296 = vadd.f32 %v294, %v295
    %v297 = vsel %vm271, %v28, 0.0
    %v298 = vadd.f32 %v296, %v297
    %v299 = vsel %vm271, %v29, 0.0
    %v300 = vadd.f32 %v298, %v299
    %v301 = vsel %vm271, %v30, 0.0
    %v302 = vadd.f32 %v300, %v301
    %v303 = vsel %vm271, %v31, 0.0
    %v304 = vadd.f32 %v302, %v303
    %v305 = vsel %vm271, %v32, 0.0
    %v306 = vadd.f32 %v304, %v305
    %v307 = vsel %vm271, %v33, 0.0
    %v308 = vadd.f32 %v306, %v307
    %v309 = vsel %vm271, %v34, 0.0
    %v310 = vadd.f32 %v308, %v309
    %v311 = vsel %vm271, %v35, 0.0
    %v312 = vadd.f32 %v310, %v311
    %v313 = vsel %vm271, %v36, 0.0
    %v314 = vadd.f32 %v312, %v313
    %v315 = vsel %vm271, %v37, 0.0
    %v316 = vadd.f32 %v314, %v315
    %v317 = vsel %vm271, %v38, 0.0
    %v318 = vadd.f32 %v316, %v317
    %v319 = vsel %vm271, %v39, 0.0
    %v320 = vadd.f32 %v318, %v319
    %v321 = vsel %vm271, %v40, 0.0
    %v322 = vadd.f32 %v320, %v321
    %v323 = vsel %vm271, %v41, 0.0
    %v324 = vadd.f32 %v322, %v323
    %v325 = vsel %vm271, %v42, 0.0
    %v326 = vadd.f32 %v324, %v325
    %v327 = vsel %vm271, %v43, 0.0
    %v328 = vadd.f32 %v326, %v327
    %v329 = vsel %vm271, %v44, 0.0
    %v330 = vadd.f32 %v328, %v329
    %v331 = vsel %vm271, %v45, 0.0
    %v332 = vadd.f32 %v330, %v331
    %v333 = vsel %vm271, %v46, 0.0
    %v334 = vadd.f32 %v332, %v333
    %v335 = vrot.slane %v334, 4
    %v336 = vadd.f32 %v334, %v335
    %v337 = vrot.slane %v336, 2
    %v338 = vadd.f32 %v336, %v337
    %v339 = vrot.slane %v338, 1
    %v340 = vadd.f32 %v338, %v339
    %v341 = vsel %vm271, %v47, 0.0
    %v342 = vsel %vm271, %v48, 0.0
    %v343 = vadd.f32 %v341, %v342
    %v344 = vsel %vm271, %v49, 0.0
    %v345 = vadd.f32 %v343, %v344
    %v346 = vsel %vm271, %v50, 0.0
    %v347 = vadd.f32 %v345, %v346
    %v348 = vsel %vm271, %v51, 0.0
    %v349 = vadd.f32 %v347, %v348
    %v350 = vsel %vm271, %v52, 0.0
    %v351 = vadd.f32 %v349, %v350
    %v352 = vsel %vm271, %v53, 0.0
    %v353 = vadd.f32 %v351, %v352
    %v354 = vsel %vm271, %v54, 0.0
    %v355 = vadd.f32 %v353, %v354
    %v356 = vsel %vm271, %v55, 0.0
    %v357 = vadd.f32 %v355, %v356
    %v358 = vsel %vm271, %v56, 0.0
    %v359 = vadd.f32 %v357, %v358
    %v360 = vsel %vm271, %v57, 0.0
    %v361 = vadd.f32 %v359, %v360
    %v362 = vsel %vm271, %v58, 0.0
    %v363 = vadd.f32 %v361, %v362
    %v364 = vsel %vm271, %v59, 0.0
    %v365 = vadd.f32 %v363, %v364
    %v366 = vsel %vm271, %v60, 0.0
    %v367 = vadd.f32 %v365, %v366
    %v368 = vsel %vm271, %v61, 0.0
    %v369 = vadd.f32 %v367, %v368
    %v370 = vsel %vm271, %v62, 0.0
    %v371 = vadd.f32 %v369, %v370
    %v372 = vsel %vm271, %v63, 0.0
    %v373 = vadd.f32 %v371, %v372
    %v374 = vsel %vm271, %v64, 0.0
    %v375 = vadd.f32 %v373, %v374
    %v376 = vsel %vm271, %v65, 0.0
    %v377 = vadd.f32 %v375, %v376
    %v378 = vsel %vm271, %v66, 0.0
    %v379 = vadd.f32 %v377, %v378
    %v380 = vsel %vm271, %v67, 0.0
    %v381 = vadd.f32 %v379, %v380
    %v382 = vsel %vm271, %v68, 0.0
    %v383 = vadd.f32 %v381, %v382
    %v384 = vsel %vm271, %v69, 0.0
    %v385 = vadd.f32 %v383, %v384
    %v386 = vsel %vm271, %v70, 0.0
    %v387 = vadd.f32 %v385, %v386
    %v388 = vsel %vm271, %v71, 0.0
    %v389 = vadd.f32 %v387, %v388
    %v390 = vsel %vm271, %v72, 0.0
    %v391 = vadd.f32 %v389, %v390
    %v392 = vsel %vm271, %v73, 0.0
    %v393 = vadd.f32 %v391, %v392
    %v394 = vsel %vm271, %v74, 0.0
    %v395 = vadd.f32 %v393, %v394
    %v396 = vsel %vm271, %v75, 0.0
    %v397 = vadd.f32 %v395, %v396
    %v398 = vsel %vm271, %v76, 0.0
    %v399 = vadd.f32 %v397, %v398
    %v400 = vsel %vm271, %v77, 0.0
    %v401 = vadd.f32 %v399, %v400
    %v402 = vsel %vm271, %v78, 0.0
    %v403 = vadd.f32 %v401, %v402
    %v404 = vrot.slane %v403, 4
    %v405 = vadd.f32 %v403, %v404
    %v406 = vrot.slane %v405, 2
    %v407 = vadd.f32 %v405, %v406
    %v408 = vrot.slane %v407, 1
    %v409 = vadd.f32 %v407, %v408
    %v410 = vsel %vm271, %v79, 0.0
    %v411 = vsel %vm271, %v80, 0.0
    %v412 = vadd.f32 %v410, %v411
    %v413 = vsel %vm271, %v81, 0.0
    %v414 = vadd.f32 %v412, %v413
    %v415 = vsel %vm271, %v82, 0.0
    %v416 = vadd.f32 %v414, %v415
    %v417 = vsel %vm271, %v83, 0.0
    %v418 = vadd.f32 %v416, %v417
    %v419 = vsel %vm271, %v84, 0.0
    %v420 = vadd.f32 %v418, %v419
    %v421 = vsel %vm271, %v85, 0.0
    %v422 = vadd.f32 %v420, %v421
    %v423 = vsel %vm271, %v86, 0.0
    %v424 = vadd.f32 %v422, %v423
    %v425 = vsel %vm271, %v87, 0.0
    %v426 = vadd.f32 %v424, %v425
    %v427 = vsel %vm271, %v88, 0.0
    %v428 = vadd.f32 %v426, %v427
    %v429 = vsel %vm271, %v89, 0.0
    %v430 = vadd.f32 %v428, %v429
    %v431 = vsel %vm271, %v90, 0.0
    %v432 = vadd.f32 %v430, %v431
    %v433 = vsel %vm271, %v91, 0.0
    %v434 = vadd.f32 %v432, %v433
    %v435 = vsel %vm271, %v92, 0.0
    %v436 = vadd.f32 %v434, %v435
    %v437 = vsel %vm271, %v93, 0.0
    %v438 = vadd.f32 %v436, %v437
    %v439 = vsel %vm271, %v94, 0.0
    %v440 = vadd.f32 %v438, %v439
    %v441 = vsel %vm271, %v95, 0.0
    %v442 = vadd.f32 %v440, %v441
    %v443 = vsel %vm271, %v96, 0.0
    %v444 = vadd.f32 %v442, %v443
    %v445 = vsel %vm271, %v97, 0.0
    %v446 = vadd.f32 %v444, %v445
    %v447 = vsel %vm271, %v98, 0.0
    %v448 = vadd.f32 %v446, %v447
    %v449 = vsel %vm271, %v99, 0.0
    %v450 = vadd.f32 %v448, %v449
    %v451 = vsel %vm271, %v100, 0.0
    %v452 = vadd.f32 %v450, %v451
    %v453 = vsel %vm271, %v101, 0.0
    %v454 = vadd.f32 %v452, %v453
    %v455 = vsel %vm271, %v102, 0.0
    %v456 = vadd.f32 %v454, %v455
    %v457 = vsel %vm271, %v103, 0.0
    %v458 = vadd.f32 %v456, %v457
    %v459 = vsel %vm271, %v104, 0.0
    %v460 = vadd.f32 %v458, %v459
    %v461 = vsel %vm271, %v105, 0.0
    %v462 = vadd.f32 %v460, %v461
    %v463 = vsel %vm271, %v106, 0.0
    %v464 = vadd.f32 %v462, %v463
    %v465 = vsel %vm271, %v107, 0.0
    %v466 = vadd.f32 %v464, %v465
    %v467 = vsel %vm271, %v108, 0.0
    %v468 = vadd.f32 %v466, %v467
    %v469 = vsel %vm271, %v109, 0.0
    %v470 = vadd.f32 %v468, %v469
    %v471 = vsel %vm271, %v110, 0.0
    %v472 = vadd.f32 %v470, %v471
    %v473 = vrot.slane %v472, 4
    %v474 = vadd.f32 %v472, %v473
    %v475 = vrot.slane %v474, 2
    %v476 = vadd.f32 %v474, %v475
    %v477 = vrot.slane %v476, 1
    %v478 = vadd.f32 %v476, %v477
    %v479 = vsel %vm271, %v111, 0.0
    %v480 = vsel %vm271, %v112, 0.0
    %v481 = vadd.f32 %v479, %v480
    %v482 = vsel %vm271, %v113, 0.0
    %v483 = vadd.f32 %v481, %v482
    %v484 = vsel %vm271, %v114, 0.0
    %v485 = vadd.f32 %v483, %v484
    %v486 = vsel %vm271, %v115, 0.0
    %v487 = vadd.f32 %v485, %v486
    %v488 = vsel %vm271, %v116, 0.0
    %v489 = vadd.f32 %v487, %v488
    %v490 = vsel %vm271, %v117, 0.0
    %v491 = vadd.f32 %v489, %v490
    %v492 = vsel %vm271, %v118, 0.0
    %v493 = vadd.f32 %v491, %v492
    %v494 = vsel %vm271, %v119, 0.0
    %v495 = vadd.f32 %v493, %v494
    %v496 = vsel %vm271, %v120, 0.0
    %v497 = vadd.f32 %v495, %v496
    %v498 = vsel %vm271, %v121, 0.0
    %v499 = vadd.f32 %v497, %v498
    %v500 = vsel %vm271, %v122, 0.0
    %v501 = vadd.f32 %v499, %v500
    %v502 = vsel %vm271, %v123, 0.0
    %v503 = vadd.f32 %v501, %v502
    %v504 = vsel %vm271, %v124, 0.0
    %v505 = vadd.f32 %v503, %v504
    %v506 = vsel %vm271, %v125, 0.0
    %v507 = vadd.f32 %v505, %v506
    %v508 = vsel %vm271, %v126, 0.0
    %v509 = vadd.f32 %v507, %v508
    %v510 = vsel %vm271, %v127, 0.0
    %v511 = vadd.f32 %v509, %v510
    %v512 = vsel %vm271, %v128, 0.0
    %v513 = vadd.f32 %v511, %v512
    %v514 = vsel %vm271, %v129, 0.0
    %v515 = vadd.f32 %v513, %v514
    %v516 = vsel %vm271, %v130, 0.0
    %v517 = vadd.f32 %v515, %v516
    %v518 = vsel %vm271, %v131, 0.0
    %v519 = vadd.f32 %v517, %v518
    %v520 = vsel %vm271, %v132, 0.0
    %v521 = vadd.f32 %v519, %v520
    %v522 = vsel %vm271, %v133, 0.0
    %v523 = vadd.f32 %v521, %v522
    %v524 = vsel %vm271, %v134, 0.0
    %v525 = vadd.f32 %v523, %v524
    %v526 = vsel %vm271, %v135, 0.0
    %v527 = vadd.f32 %v525, %v526
    %v528 = vsel %vm271, %v136, 0.0
    %v529 = vadd.f32 %v527, %v528
    %v530 = vsel %vm271, %v137, 0.0
    %v531 = vadd.f32 %v529, %v530
    %v532 = vsel %vm271, %v138, 0.0
    %v533 = vadd.f32 %v531, %v532
    %v534 = vsel %vm271, %v139, 0.0
    %v535 = vadd.f32 %v533, %v534
    %v536 = vsel %vm271, %v140, 0.0
    %v537 = vadd.f32 %v535, %v536
    %v538 = vsel %vm271, %v141, 0.0
    %v539 = vadd.f32 %v537, %v538
    %v540 = vsel %vm271, %v142, 0.0
    %v541 = vadd.f32 %v539, %v540
    %v542 = vrot.slane %v541, 4
    %v543 = vadd.f32 %v541, %v542
    %v544 = vrot.slane %v543, 2
    %v545 = vadd.f32 %v543, %v544
    %v546 = vrot.slane %v545, 1
    %v547 = vadd.f32 %v545, %v546
    %v548 = vsel %vm271, %v143, 0.0
    %v549 = vsel %vm271, %v144, 0.0
    %v550 = vadd.f32 %v548, %v549
    %v551 = vsel %vm271, %v145, 0.0
    %v552 = vadd.f32 %v550, %v551
    %v553 = vsel %vm271, %v146, 0.0
    %v554 = vadd.f32 %v552, %v553
    %v555 = vsel %vm271, %v147, 0.0
    %v556 = vadd.f32 %v554, %v555
    %v557 = vsel %vm271, %v148, 0.0
    %v558 = vadd.f32 %v556, %v557
    %v559 = vsel %vm271, %v149, 0.0
    %v560 = vadd.f32 %v558, %v559
    %v561 = vsel %vm271, %v150, 0.0
    %v562 = vadd.f32 %v560, %v561
    %v563 = vsel %vm271, %v151, 0.0
    %v564 = vadd.f32 %v562, %v563
    %v565 = vsel %vm271, %v152, 0.0
    %v566 = vadd.f32 %v564, %v565
    %v567 = vsel %vm271, %v153, 0.0
    %v568 = vadd.f32 %v566, %v567
    %v569 = vsel %vm271, %v154, 0.0
    %v570 = vadd.f32 %v568, %v569
    %v571 = vsel %vm271, %v155, 0.0
    %v572 = vadd.f32 %v570, %v571
    %v573 = vsel %vm271, %v156, 0.0
    %v574 = vadd.f32 %v572, %v573
    %v575 = vsel %vm271, %v157, 0.0
    %v576 = vadd.f32 %v574, %v575
    %v577 = vsel %vm271, %v158, 0.0
    %v578 = vadd.f32 %v576, %v577
    %v579 = vsel %vm271, %v159, 0.0
    %v580 = vadd.f32 %v578, %v579
    %v581 = vsel %vm271, %v160, 0.0
    %v582 = vadd.f32 %v580, %v581
    %v583 = vsel %vm271, %v161, 0.0
    %v584 = vadd.f32 %v582, %v583
    %v585 = vsel %vm271, %v162, 0.0
    %v586 = vadd.f32 %v584, %v585
    %v587 = vsel %vm271, %v163, 0.0
    %v588 = vadd.f32 %v586, %v587
    %v589 = vsel %vm271, %v164, 0.0
    %v590 = vadd.f32 %v588, %v589
    %v591 = vsel %vm271, %v165, 0.0
    %v592 = vadd.f32 %v590, %v591
    %v593 = vsel %vm271, %v166, 0.0
    %v594 = vadd.f32 %v592, %v593
    %v595 = vsel %vm271, %v167, 0.0
    %v596 = vadd.f32 %v594, %v595
    %v597 = vsel %vm271, %v168, 0.0
    %v598 = vadd.f32 %v596, %v597
    %v599 = vsel %vm271, %v169, 0.0
    %v600 = vadd.f32 %v598, %v599
    %v601 = vsel %vm271, %v170, 0.0
    %v602 = vadd.f32 %v600, %v601
    %v603 = vsel %vm271, %v171, 0.0
    %v604 = vadd.f32 %v602, %v603
    %v605 = vsel %vm271, %v172, 0.0
    %v606 = vadd.f32 %v604, %v605
    %v607 = vsel %vm271, %v173, 0.0
    %v608 = vadd.f32 %v606, %v607
    %v609 = vsel %vm271, %v174, 0.0
    %v610 = vadd.f32 %v608, %v609
    %v611 = vrot.slane %v610, 4
    %v612 = vadd.f32 %v610, %v611
    %v613 = vrot.slane %v612, 2
    %v614 = vadd.f32 %v612, %v613
    %v615 = vrot.slane %v614, 1
    %v616 = vadd.f32 %v614, %v615
    %v617 = vsel %vm271, %v175, 0.0
    %v618 = vsel %vm271, %v176, 0.0
    %v619 = vadd.f32 %v617, %v618
    %v620 = vsel %vm271, %v177, 0.0
    %v621 = vadd.f32 %v619, %v620
    %v622 = vsel %vm271, %v178, 0.0
    %v623 = vadd.f32 %v621, %v622
    %v624 = vsel %vm271, %v179, 0.0
    %v625 = vadd.f32 %v623, %v624
    %v626 = vsel %vm271, %v180, 0.0
    %v627 = vadd.f32 %v625, %v626
    %v628 = vsel %vm271, %v181, 0.0
    %v629 = vadd.f32 %v627, %v628
    %v630 = vsel %vm271, %v182, 0.0
    %v631 = vadd.f32 %v629, %v630
    %v632 = vsel %vm271, %v183, 0.0
    %v633 = vadd.f32 %v631, %v632
    %v634 = vsel %vm271, %v184, 0.0
    %v635 = vadd.f32 %v633, %v634
    %v636 = vsel %vm271, %v185, 0.0
    %v637 = vadd.f32 %v635, %v636
    %v638 = vsel %vm271, %v186, 0.0
    %v639 = vadd.f32 %v637, %v638
    %v640 = vsel %vm271, %v187, 0.0
    %v641 = vadd.f32 %v639, %v640
    %v642 = vsel %vm271, %v188, 0.0
    %v643 = vadd.f32 %v641, %v642
    %v644 = vsel %vm271, %v189, 0.0
    %v645 = vadd.f32 %v643, %v644
    %v646 = vsel %vm271, %v190, 0.0
    %v647 = vadd.f32 %v645, %v646
    %v648 = vsel %vm271, %v191, 0.0
    %v649 = vadd.f32 %v647, %v648
    %v650 = vsel %vm271, %v192, 0.0
    %v651 = vadd.f32 %v649, %v650
    %v652 = vsel %vm271, %v193, 0.0
    %v653 = vadd.f32 %v651, %v652
    %v654 = vsel %vm271, %v194, 0.0
    %v655 = vadd.f32 %v653, %v654
    %v656 = vsel %vm271, %v195, 0.0
    %v657 = vadd.f32 %v655, %v656
    %v658 = vsel %vm271, %v196, 0.0
    %v659 = vadd.f32 %v657, %v658
    %v660 = vsel %vm271, %v197, 0.0
    %v661 = vadd.f32 %v659, %v660
    %v662 = vsel %vm271, %v198, 0.0
    %v663 = vadd.f32 %v661, %v662
    %v664 = vsel %vm271, %v199, 0.0
    %v665 = vadd.f32 %v663, %v664
    %v666 = vsel %vm271, %v200, 0.0
    %v667 = vadd.f32 %v665, %v666
    %v668 = vsel %vm271, %v201, 0.0
    %v669 = vadd.f32 %v667, %v668
    %v670 = vsel %vm271, %v202, 0.0
    %v671 = vadd.f32 %v669, %v670
    %v672 = vsel %vm271, %v203, 0.0
    %v673 = vadd.f32 %v671, %v672
    %v674 = vsel %vm271, %v204, 0.0
    %v675 = vadd.f32 %v673, %v674
    %v676 = vsel %vm271, %v205, 0.0
    %v677 = vadd.f32 %v675, %v676
    %v678 = vsel %vm271, %v206, 0.0
    %v679 = vadd.f32 %v677, %v678
    %v680 = vrot.slane %v679, 4
    %v681 = vadd.f32 %v679, %v680
    %v682 = vrot.slane %v681, 2
    %v683 = vadd.f32 %v681, %v682
    %v684 = vrot.slane %v683, 1
    %v685 = vadd.f32 %v683, %v684
    %v686 = vsel %vm271, %v207, 0.0
    %v687 = vsel %vm271, %v208, 0.0
    %v688 = vadd.f32 %v686, %v687
    %v689 = vsel %vm271, %v209, 0.0
    %v690 = vadd.f32 %v688, %v689
    %v691 = vsel %vm271, %v210, 0.0
    %v692 = vadd.f32 %v690, %v691
    %v693 = vsel %vm271, %v211, 0.0
    %v694 = vadd.f32 %v692, %v693
    %v695 = vsel %vm271, %v212, 0.0
    %v696 = vadd.f32 %v694, %v695
    %v697 = vsel %vm271, %v213, 0.0
    %v698 = vadd.f32 %v696, %v697
    %v699 = vsel %vm271, %v214, 0.0
    %v700 = vadd.f32 %v698, %v699
    %v701 = vsel %vm271, %v215, 0.0
    %v702 = vadd.f32 %v700, %v701
    %v703 = vsel %vm271, %v216, 0.0
    %v704 = vadd.f32 %v702, %v703
    %v705 = vsel %vm271, %v217, 0.0
    %v706 = vadd.f32 %v704, %v705
    %v707 = vsel %vm271, %v218, 0.0
    %v708 = vadd.f32 %v706, %v707
    %v709 = vsel %vm271, %v219, 0.0
    %v710 = vadd.f32 %v708, %v709
    %v711 = vsel %vm271, %v220, 0.0
    %v712 = vadd.f32 %v710, %v711
    %v713 = vsel %vm271, %v221, 0.0
    %v714 = vadd.f32 %v712, %v713
    %v715 = vsel %vm271, %v222, 0.0
    %v716 = vadd.f32 %v714, %v715
    %v717 = vsel %vm271, %v223, 0.0
    %v718 = vadd.f32 %v716, %v717
    %v719 = vsel %vm271, %v224, 0.0
    %v720 = vadd.f32 %v718, %v719
    %v721 = vsel %vm271, %v225, 0.0
    %v722 = vadd.f32 %v720, %v721
    %v723 = vsel %vm271, %v226, 0.0
    %v724 = vadd.f32 %v722, %v723
    %v725 = vsel %vm271, %v227, 0.0
    %v726 = vadd.f32 %v724, %v725
    %v727 = vsel %vm271, %v228, 0.0
    %v728 = vadd.f32 %v726, %v727
    %v729 = vsel %vm271, %v229, 0.0
    %v730 = vadd.f32 %v728, %v729
    %v731 = vsel %vm271, %v230, 0.0
    %v732 = vadd.f32 %v730, %v731
    %v733 = vsel %vm271, %v231, 0.0
    %v734 = vadd.f32 %v732, %v733
    %v735 = vsel %vm271, %v232, 0.0
    %v736 = vadd.f32 %v734, %v735
    %v737 = vsel %vm271, %v233, 0.0
    %v738 = vadd.f32 %v736, %v737
    %v739 = vsel %vm271, %v234, 0.0
    %v740 = vadd.f32 %v738, %v739
    %v741 = vsel %vm271, %v235, 0.0
    %v742 = vadd.f32 %v740, %v741
    %v743 = vsel %vm271, %v236, 0.0
    %v744 = vadd.f32 %v742, %v743
    %v745 = vsel %vm271, %v237, 0.0
    %v746 = vadd.f32 %v744, %v745
    %v747 = vsel %vm271, %v238, 0.0
    %v748 = vadd.f32 %v746, %v747
    %v749 = vrot.slane %v748, 4
    %v750 = vadd.f32 %v748, %v749
    %v751 = vrot.slane %v750, 2
    %v752 = vadd.f32 %v750, %v751
    %v753 = vrot.slane %v752, 1
    %v754 = vadd.f32 %v752, %v753
    %v755 = vsel %vm271, %v239, 0.0
    %v756 = vsel %vm271, %v240, 0.0
    %v757 = vadd.f32 %v755, %v756
    %v758 = vsel %vm271, %v241, 0.0
    %v759 = vadd.f32 %v757, %v758
    %v760 = vsel %vm271, %v242, 0.0
    %v761 = vadd.f32 %v759, %v760
    %v762 = vsel %vm271, %v243, 0.0
    %v763 = vadd.f32 %v761, %v762
    %v764 = vsel %vm271, %v244, 0.0
    %v765 = vadd.f32 %v763, %v764
    %v766 = vsel %vm271, %v245, 0.0
    %v767 = vadd.f32 %v765, %v766
    %v768 = vsel %vm271, %v246, 0.0
    %v769 = vadd.f32 %v767, %v768
    %v770 = vsel %vm271, %v247, 0.0
    %v771 = vadd.f32 %v769, %v770
    %v772 = vsel %vm271, %v248, 0.0
    %v773 = vadd.f32 %v771, %v772
    %v774 = vsel %vm271, %v249, 0.0
    %v775 = vadd.f32 %v773, %v774
    %v776 = vsel %vm271, %v250, 0.0
    %v777 = vadd.f32 %v775, %v776
    %v778 = vsel %vm271, %v251, 0.0
    %v779 = vadd.f32 %v777, %v778
    %v780 = vsel %vm271, %v252, 0.0
    %v781 = vadd.f32 %v779, %v780
    %v782 = vsel %vm271, %v253, 0.0
    %v783 = vadd.f32 %v781, %v782
    %v784 = vsel %vm271, %v254, 0.0
    %v785 = vadd.f32 %v783, %v784
    %v786 = vsel %vm271, %v255, 0.0
    %v787 = vadd.f32 %v785, %v786
    %v788 = vsel %vm271, %v256, 0.0
    %v789 = vadd.f32 %v787, %v788
    %v790 = vsel %vm271, %v257, 0.0
    %v791 = vadd.f32 %v789, %v790
    %v792 = vsel %vm271, %v258, 0.0
    %v793 = vadd.f32 %v791, %v792
    %v794 = vsel %vm271, %v259, 0.0
    %v795 = vadd.f32 %v793, %v794
    %v796 = vsel %vm271, %v260, 0.0
    %v797 = vadd.f32 %v795, %v796
    %v798 = vsel %vm271, %v261, 0.0
    %v799 = vadd.f32 %v797, %v798
    %v800 = vsel %vm271, %v262, 0.0
    %v801 = vadd.f32 %v799, %v800
    %v802 = vsel %vm271, %v263, 0.0
    %v803 = vadd.f32 %v801, %v802
    %v804 = vsel %vm271, %v264, 0.0
    %v805 = vadd.f32 %v803, %v804
    %v806 = vsel %vm271, %v265, 0.0
    %v807 = vadd.f32 %v805, %v806
    %v808 = vsel %vm271, %v266, 0.0
    %v809 = vadd.f32 %v807, %v808
    %v810 = vsel %vm271, %v267, 0.0
    %v811 = vadd.f32 %v809, %v810
    %v812 = vsel %vm271, %v268, 0.0
    %v813 = vadd.f32 %v811, %v812
    %v814 = vsel %vm271, %v269, 0.0
    %v815 = vadd.f32 %v813, %v814
    %v816 = vsel %vm271, %v270, 0.0
    %v817 = vadd.f32 %v815, %v816
    %v818 = vrot.slane %v817, 4
    %v819 = vadd.f32 %v817, %v818
    %v820 = vrot.slane %v819, 2
    %v821 = vadd.f32 %v819, %v820
    %v822 = vrot.slane %v821, 1
    %v823 = vadd.f32 %v821, %v822
    %v824 = vld [vmem:[%s1] sm:$0xf]
    %v825 = vld [vmem:[%s2] sm:$0x1]
    %v827 = vperm.slane %v825, 0
    %vm837 = vcmask 1041409
    %v838 = vsel %vm837, %v409, %v340
    %vm839 = vcmask 1042434
    %v840 = vsel %vm839, %v478, %v838
    %vm841 = vcmask 1043459
    %v842 = vsel %vm841, %v547, %v840
    %vm843 = vcmask 1044484
    %v844 = vsel %vm843, %v616, %v842
    %vm845 = vcmask 1045509
    %v846 = vsel %vm845, %v685, %v844
    %vm847 = vcmask 1046534
    %v848 = vsel %vm847, %v754, %v846
    %vm849 = vcmask 1047559
    %v850 = vsel %vm849, %v823, %v848
    %v851 = vsel %vm271, %v850, 0
    %vm853 = vcmask 1043456
    %v855 = vsel %vm853, %v824, 0
    %857 = vmatpush.msra.mxu0 0.0
    %858 = vmatpush.msra.mxu0 0.0
    %859 = vmatpush.msra.mxu0 0.0
    %860 = vmatpush.msra.mxu0 0.0
    %861 = vmatpush.msra.mxu0 0.0
    %862 = vmatpush.msra.mxu0 0.0
    %863 = vmatpush.msra.mxu0 0.0
    %864 = vmatpush.msra.mxu0 0.0
    %865 = vmatpush.msra.mxu0 0.0
    %866 = vmatpush.msra.mxu0 0.0
    %867 = vmatpush.msra.mxu0 0.0
    %868 = vmatpush.msra.mxu0 0.0
    %869 = vmatpush.msra.mxu0 0.0
    %870 = vmatpush.msra.mxu0 0.0
    %871 = vmatpush.msra.mxu0 0.0
    %872 = vmatpush.msra.mxu0 %v855
    %873 = vmatmul.f32.gmra.mxu0 %v851
    %v874 = vpop.f32.mrf.mxu0
    %v875 = vadd.f32 %v827, %v874
    %876 = vdwg.mxu0
    %877 = vst [vmem:[#allocation2] sm:$0xff] %v875
    // Predicated region
    $region14: #{tpu_custom_call.1} parent=1 // pred_check
      _
    $region15: #{tpu_custom_call.1} parent=1 // pred_check_branch
      %879 = sbr.rel (0) target = $region17
    $region16: #{tpu_custom_call.1} parent=1 // pred_region
      %881 = vsyncadd [#allocation3], 0
      %s883 = sshll.u32 [#allocation2], 4
      %s884 = int_to_ptr.vmem [resolvable:$true] %s883
      %s885 = sshll.u32 %s3, 4
      %s886 = int_to_ptr.hbm [resolvable:$true] %s885
      %888 = dma.vmem_to_hbm [thread:$0]  %s884, 128, %s886, [#allocation3]
    $region17: #{tpu_custom_call.1} parent=1 // pred_fallthru
      _
    // Predicated region
    $region18: #{tpu_custom_call.1} parent=1 // pred_check
      _
    $region19: #{tpu_custom_call.1} parent=1 // pred_check_branch
      %890 = sbr.rel (0) target = $region21
    $region20: #{tpu_custom_call.1} parent=1 // pred_region
      %892 = dma.done [#allocation3], 128
    $region21: #{tpu_custom_call.1} parent=1 // pred_fallthru
      _
    %893 = vsyncpa [#allocation3], 1

</llo_original>
